<compile_context>
chip_gen: v6e
topology: v6e:2x2x1
jax: 0.10.0
libtpu: 0.0.40
codegen_flags: <defaults>
</compile_context>

<pallas_src>
import math

import jax
import jax.numpy as jnp
from jax.experimental import pallas as pl
from jax.experimental.pallas import tpu as pltpu

LANE = 128
SUBLANE = 8
VMEM_LIMIT = 32 * 1024 * 1024     # scoped VMEM limit: raises v5e's 16 MiB default,
                                  # equals v6e default, safely under v7x's 64 MiB.
VMEM_HEADROOM = 2 * 1024 * 1024   # slack for compiler-internal scratch / spills.


def _round_up(x: int, m: int) -> int:
    return ((x + m - 1) // m) * m


def _mlp_kernel(x_ref, w1_ref, b1_ref, w2_ref, b2_ref, o_ref):
    # Stage 1: cast x f32 -> bf16 in-kernel (no separate wrapper pass over x),
    # bf16 x bf16 -> f32 accumulate on the MXU.
    x = x_ref[...].astype(jnp.bfloat16)
    h = jnp.dot(x, w1_ref[...], preferred_element_type=jnp.float32)
    # f32 bias + ReLU epilogue on the VPU.
    h = jnp.maximum(h + b1_ref[...], 0.0)
    # Stage 2: HighLevelLayer(10, 16) == affine projection; single bf16 MXU pass.
    out = jnp.dot(h.astype(jnp.bfloat16), w2_ref[...],
                  preferred_element_type=jnp.float32)
    o_ref[...] = (out + b2_ref[...]).astype(o_ref.dtype)


def _choose_tb(B: int, D: int, N: int) -> int:
    """Pick a batch tile from the VMEM budget (double-buffered blocks)."""
    # Resident (double-buffered) weights/biases in VMEM.
    resident = 2 * (D * LANE * 2 + LANE * 4 + LANE * N * 2 + N * 4)
    # Per batch row: x block (f32) + out block (f32), each double-buffered.
    per_row = 2 * (D * 4 + N * 4)
    budget = VMEM_LIMIT - VMEM_HEADROOM - resident
    cap = max(budget // per_row, SUBLANE)
    cap = min(cap, 2048)                       # amortize ~0.35 us/step at small D
    cap = (cap // SUBLANE) * SUBLANE
    if B < 2 * SUBLANE:
        return B                               # block == full batch dim (layout rule ok)
    # Keep >= 2 grid steps so ("parallel",) can shard batch tiles across
    # v7x's two TensorCores.
    tb = min(cap, _round_up(pl.cdiv(B, 2), SUBLANE))
    return max(tb, SUBLANE)


def test_model_forward(x, w1, b1, w2, b2, *, tb=None):
    """x: [B, ...] float32, flattened row-major (matches nn.Flatten).
    w1: [D, 10], b1: [10] or [1, 10], w2: [10, 16], b2: [16] or [1, 16].
    Returns logits [B, 16] (float32)."""
    B = x.shape[0]
    D = math.prod(x.shape[1:])
    x_flat = x.reshape(B, D)                   # stays f32; cast happens in-kernel

    H = w1.shape[-1]   # 10
    N = w2.shape[-1]   # 16

    # Zero-pad the hidden dim to a lane-dense 128 (MXU-friendly); output dim
    # stays at its true width so writeback is only B*16*4 bytes.
    HP = _round_up(max(H, 1), LANE)
    w1p = jnp.zeros((D, HP), jnp.bfloat16).at[:, :H].set(w1.astype(jnp.bfloat16))
    b1p = jnp.zeros((1, HP), jnp.float32).at[:, :H].set(b1.reshape(1, H).astype(jnp.float32))
    w2p = jnp.zeros((HP, N), jnp.bfloat16).at[:H, :].set(w2.astype(jnp.bfloat16))
    b2p = b2.reshape(1, N).astype(jnp.float32)

    if tb is None:
        tb = _choose_tb(B, D, N)
    grid = (pl.cdiv(B, tb),)                   # no batch padding; last block masked

    bytes_accessed = (x_flat.size * 4 + w1p.size * 2 + b1p.size * 4
                      + w2p.size * 2 + b2p.size * 4 + B * N * 4)

    out = pl.pallas_call(
        _mlp_kernel,
        out_shape=jax.ShapeDtypeStruct((B, N), jnp.float32),
        grid_spec=pltpu.PrefetchScalarGridSpec(
            num_scalar_prefetch=0,
            grid=grid,
            in_specs=[
                pl.BlockSpec((tb, D), lambda i: (i, 0)),    # x: tiled over batch
                pl.BlockSpec((D, HP), lambda i: (0, 0)),    # weights stay VMEM-resident
                pl.BlockSpec((1, HP), lambda i: (0, 0)),
                pl.BlockSpec((HP, N), lambda i: (0, 0)),
                pl.BlockSpec((1, N), lambda i: (0, 0)),
            ],
            out_specs=pl.BlockSpec((tb, N), lambda i: (i, 0)),
        ),
        compiler_params=pltpu.CompilerParams(
            dimension_semantics=("parallel",),
            vmem_limit_bytes=VMEM_LIMIT,
        ),
        cost_estimate=pl.CostEstimate(
            flops=2 * B * D * H + 2 * B * H * N,            # true dims, not padded
            transcendentals=0,
            bytes_accessed=bytes_accessed,
        ),
    )(x_flat, w1p, b1p, w2p, b2p)

    return out   # already [B, 16]; no padded-slab slice / extra HBM pass


if __name__ == "__main__":
    # Small shapes consistent with the module: x = [2, 4, 8, 8] -> input_size = 256
    B, C, Hs, Ws = 2, 4, 8, 8
    D = C * Hs * Ws        # input_size = 256
    HID = 10               # Linear(input_size, 10)
    OUT = 16               # HighLevelLayer(10, 16)

    key = jax.random.PRNGKey(0)
    kx, k1, k2, k3, k4 = jax.random.split(key, 5)

    x = jax.random.normal(kx, (B, C, Hs, Ws), dtype=jnp.float32)

    # Deterministic parameter init (uniform +-1/sqrt(fan_in), like torch default)
    lim1 = 1.0 / (D ** 0.5)
    w1 = jax.random.uniform(k1, (D, HID), jnp.float32, -lim1, lim1)
    b1 = jax.random.uniform(k2, (1, HID), jnp.float32, -lim1, lim1)
    lim2 = 1.0 / (HID ** 0.5)
    w2 = jax.random.uniform(k3, (HID, OUT), jnp.float32, -lim2, lim2)
    b2 = jax.random.uniform(k4, (1, OUT), jnp.float32, -lim2, lim2)

    logits = test_model_forward(x, w1, b1, w2, b2)
    jax.block_until_ready(logits)

    # Pure-JAX reference mirroring the kernel's bf16 quantization of the
    # matmul operands (accumulation stays f32), so the comparison is tight.
    f32 = jnp.float32
    xb = x.reshape(B, D).astype(jnp.bfloat16).astype(f32)
    w1b = w1.astype(jnp.bfloat16).astype(f32)
    hb = jnp.maximum(xb @ w1b + b1, 0.0)
    ref = hb.astype(jnp.bfloat16).astype(f32) @ w2.astype(jnp.bfloat16).astype(f32) + b2

    assert logits.shape == (B, OUT)
    assert jnp.allclose(logits, ref, atol=1e-2, rtol=1e-2)

    print("KERNEL_OK")
</pallas_src>

<mosaic_0001>
module attributes {stable_mosaic.version = 11 : i64} {
  func.func @_mlp_kernel(%arg0: i32, %arg1: memref<2x256xf32, #tpu.memory_space<vmem>>, %arg2: memref<256x128xbf16, #tpu.memory_space<vmem>>, %arg3: memref<1x128xf32, #tpu.memory_space<vmem>>, %arg4: memref<128x16xbf16, #tpu.memory_space<vmem>>, %arg5: memref<1x16xf32, #tpu.memory_space<vmem>>, %arg6: memref<2x16xf32, #tpu.memory_space<vmem>>) attributes {dimension_semantics = [#tpu.dimension_semantics<parallel>], iteration_bounds = array<i64: 1>, scalar_prefetch = 0 : i64, scratch_operands = 0 : i64, tpu.core_type = #tpu.core_type<tc>, window_params = [{transform_indices = @transform_0, window_bounds = array<i64: 2, 256>}, {pipeline_mode = #tpu.pipeline_mode<synchronous>, transform_indices = @transform_1, window_bounds = array<i64: 256, 128>}, {pipeline_mode = #tpu.pipeline_mode<synchronous>, transform_indices = @transform_2, window_bounds = array<i64: 1, 128>}, {pipeline_mode = #tpu.pipeline_mode<synchronous>, transform_indices = @transform_3, window_bounds = array<i64: 128, 16>}, {pipeline_mode = #tpu.pipeline_mode<synchronous>, transform_indices = @transform_4, window_bounds = array<i64: 1, 16>}, {transform_indices = @transform_5, window_bounds = array<i64: 2, 16>}]} {
    %c0 = arith.constant 0 : index
    %c0_0 = arith.constant 0 : index
    %0 = vector.load %arg1[%c0, %c0_0] : memref<2x256xf32, #tpu.memory_space<vmem>>, vector<2x256xf32>
    %1 = arith.truncf %0 : vector<2x256xf32> to vector<2x256xbf16>
    %c0_1 = arith.constant 0 : index
    %c0_2 = arith.constant 0 : index
    %2 = vector.load %arg2[%c0_1, %c0_2] : memref<256x128xbf16, #tpu.memory_space<vmem>>, vector<256x128xbf16>
    %cst = arith.constant dense<0.000000e+00> : vector<2x128xf32>
    %3 = tpu.matmul %1, %2, %cst {dimension_numbers = #tpu.dot_dimension_numbers<[1], [0], [0], [1], [0, 0, 1, 1], [], []>} : vector<2x256xbf16>, vector<256x128xbf16>, vector<2x128xf32> -> vector<2x128xf32>
    %c0_3 = arith.constant 0 : index
    %c0_4 = arith.constant 0 : index
    %4 = vector.load %arg3[%c0_3, %c0_4] : memref<1x128xf32, #tpu.memory_space<vmem>>, vector<1x128xf32>
    %5 = vector.broadcast %4 : vector<1x128xf32> to vector<2x128xf32>
    %6 = arith.addf %3, %5 : vector<2x128xf32>
    %cst_5 = arith.constant 0.000000e+00 : f32
    %7 = vector.broadcast %cst_5 : f32 to vector<2x128xf32>
    %8 = arith.maximumf %6, %7 : vector<2x128xf32>
    %9 = arith.truncf %8 : vector<2x128xf32> to vector<2x128xbf16>
    %c0_6 = arith.constant 0 : index
    %c0_7 = arith.constant 0 : index
    %10 = vector.load %arg4[%c0_6, %c0_7] : memref<128x16xbf16, #tpu.memory_space<vmem>>, vector<128x16xbf16>
    %cst_8 = arith.constant dense<0.000000e+00> : vector<2x16xf32>
    %11 = tpu.matmul %9, %10, %cst_8 {dimension_numbers = #tpu.dot_dimension_numbers<[1], [0], [0], [1], [0, 0, 1, 1], [], []>} : vector<2x128xbf16>, vector<128x16xbf16>, vector<2x16xf32> -> vector<2x16xf32>
    %c0_9 = arith.constant 0 : index
    %c0_10 = arith.constant 0 : index
    %12 = vector.load %arg5[%c0_9, %c0_10] : memref<1x16xf32, #tpu.memory_space<vmem>>, vector<1x16xf32>
    %13 = vector.broadcast %12 : vector<1x16xf32> to vector<2x16xf32>
    %14 = arith.addf %11, %13 : vector<2x16xf32>
    %c0_11 = arith.constant 0 : index
    %c0_12 = arith.constant 0 : index
    %15 = vector.load %arg6[%c0_11, %c0_12] : memref<2x16xf32, #tpu.memory_space<vmem>>, vector<2x16xf32>
    tpu.vector_store %arg6[%c0_11, %c0_12], %14 {strides = array<i32>} : memref<2x16xf32, #tpu.memory_space<vmem>>, vector<2x16xf32>,
    return
  }
  func.func @transform_0(%arg0: i32) -> (i32, i32) {
    %c0_i32 = arith.constant 0 : i32
    %c0_i32_0 = arith.constant 0 : i32
    return %arg0, %c0_i32 : i32, i32
  }
  func.func @transform_1(%arg0: i32) -> (i32, i32) {
    %c0_i32 = arith.constant 0 : i32
    %c0_i32_0 = arith.constant 0 : i32
    %c0_i32_1 = arith.constant 0 : i32
    return %c0_i32, %c0_i32_0 : i32, i32
  }
  func.func @transform_2(%arg0: i32) -> (i32, i32) {
    %c0_i32 = arith.constant 0 : i32
    %c0_i32_0 = arith.constant 0 : i32
    %c0_i32_1 = arith.constant 0 : i32
    return %c0_i32, %c0_i32_0 : i32, i32
  }
  func.func @transform_3(%arg0: i32) -> (i32, i32) {
    %c0_i32 = arith.constant 0 : i32
    %c0_i32_0 = arith.constant 0 : i32
    %c0_i32_1 = arith.constant 0 : i32
    return %c0_i32, %c0_i32_0 : i32, i32
  }
  func.func @transform_4(%arg0: i32) -> (i32, i32) {
    %c0_i32 = arith.constant 0 : i32
    %c0_i32_0 = arith.constant 0 : i32
    %c0_i32_1 = arith.constant 0 : i32
    return %c0_i32, %c0_i32_0 : i32, i32
  }
  func.func @transform_5(%arg0: i32) -> (i32, i32) {
    %c0_i32 = arith.constant 0 : i32
    %c0_i32_0 = arith.constant 0 : i32
    return %arg0, %c0_i32 : i32, i32
  }
}

</mosaic_0001>

<llo_original>
// kernel: tpu_custom_call.1
$region0: #{tpu_custom_call.1}
  #allocation0 [shape = 'u32[]', space=smem, size = 0x4, offset = 0x4, fixed_abs, tag = 'smem constant byte address 0x4 - core index']
  #allocation1 [shape = 'u32[144,128]{1,0:T(1,128)}', space=vmem, size = 0x12000, scoped, tag = 'internal scratch']
  %s0 = inlined_call_operand.vmem [shape: f32[2,256], index: 0, kind: input, shape index: {}]
  %s1 = inlined_call_operand.hbm [shape: bf16[256,128], index: 1, kind: input, shape index: {}]
  %s2 = inlined_call_operand.vmem [shape: f32[1,128], index: 2, kind: input, shape index: {}]
  %s3 = inlined_call_operand.vmem [shape: bf16[128,16], index: 3, kind: input, shape index: {}]
  %s4 = inlined_call_operand.vmem [shape: f32[1,16], index: 4, kind: input, shape index: {}]
  %s5 = inlined_call_operand.hbm [shape: f32[2,16], index: 5, kind: output, shape index: {}]
  %s6 = sld [smem:[#allocation0]]
  $region34: #{tpu_custom_call.1} parent=0
    _
  %s8 = ssub.s32 1, %s6
  %s9 = scalar_select 0, %s8, %s6
  $region1: #{tpu_custom_call.1} parent=0
    #allocation2 [shape = 'u8[65536]{0}', space=vmem, size = 0x10000, scoped, tag = 'input window, operand 1, single buffered']
    #allocation3 [shape = 's32[1]{0}', space=sflag, size = 0x4, scoped, tag = 'scoped memory for tpu_custom_call.1']
    #allocation4 [shape = 's32[1]{0}', space=sflag, size = 0x4, scoped, tag = 'scoped memory for tpu_custom_call.1']
    #allocation5 [shape = 'u8[1024]{0}', space=vmem, size = 0x400, scoped, tag = 'output window, operand 0, single buffered']
    %10 = vsyncpa [#allocation3], 0
    %11 = vsyncpa [#allocation4], 0
    // Predicated region
    $region2: #{tpu_custom_call.1} parent=1 // pred_check
      _
    $region3: #{tpu_custom_call.1} parent=1 // pred_check_branch
      %13 = sbr.rel (0) target = $region5
    $region4: #{tpu_custom_call.1} parent=1 // pred_region
      _
    $region5: #{tpu_custom_call.1} parent=1 // pred_fallthru
      _
    // Predicated region
    $region6: #{tpu_custom_call.1} parent=1 // pred_check
      _
    $region7: #{tpu_custom_call.1} parent=1 // pred_check_branch
      %15 = sbr.rel (0) target = $region9
    $region8: #{tpu_custom_call.1} parent=1 // pred_region
      %s17 = ssub.s32 2048, 2048
      %18 = vsyncadd [#allocation3], %s17
      %s19 = sshll.u32 [#allocation2], 4
      %s20 = int_to_ptr.vmem [resolvable:$true] %s19
      %25 = dma.hbm_to_vmem [thread:$0]  %s1, 2048, %s20, [#allocation3], 64, 64, 4
    $region9: #{tpu_custom_call.1} parent=1 // pred_fallthru
      _
    // Predicated region
    $region10: #{tpu_custom_call.1} parent=1 // pred_check
      _
    $region11: #{tpu_custom_call.1} parent=1 // pred_check_branch
      %27 = sbr.rel (0) target = $region13
    $region12: #{tpu_custom_call.1} parent=1 // pred_region
      _
    $region13: #{tpu_custom_call.1} parent=1 // pred_fallthru
      _
    // Predicated region
    $region14: #{tpu_custom_call.1} parent=1 // pred_check
      _
    $region15: #{tpu_custom_call.1} parent=1 // pred_check_branch
      %29 = sbr.rel (0) target = $region17
    $region16: #{tpu_custom_call.1} parent=1 // pred_region
      _
    $region17: #{tpu_custom_call.1} parent=1 // pred_fallthru
      _
    // Predicated region
    $region18: #{tpu_custom_call.1} parent=1 // pred_check
      _
    $region19: #{tpu_custom_call.1} parent=1 // pred_check_branch
      %31 = sbr.rel (0) target = $region21
    $region20: #{tpu_custom_call.1} parent=1 // pred_region
      _
    $region21: #{tpu_custom_call.1} parent=1 // pred_fallthru
      _
    // Predicated region
    $region22: #{tpu_custom_call.1} parent=1 // pred_check
      _
    $region23: #{tpu_custom_call.1} parent=1 // pred_check_branch
      %33 = sbr.rel (0) target = $region25
    $region24: #{tpu_custom_call.1} parent=1 // pred_region
      %34 = dma.done [#allocation3], 2048
    $region25: #{tpu_custom_call.1} parent=1 // pred_fallthru
      _
    %v36 = vld [vmem:[%s0] sm:$0xf]
    %v39 = vunpack.c.l.s4 1983009808
    %v40 = vunpack.c.0.s8 %v39
    %v41 = vlaneseq
    %v42 = vshrl.u32 %v41, 7
    %v43 = vsub.s32 %v40, %v42
    %v44 = vrot.slane %v36, %v43
    %v45 = vcombine.high %v44, %v44
    %v48 = vpack.c.bf16 %v44, %v44
    %v49 = vpack.c.bf16 %v45, %v45
    %v50 = vld [vmem:[#allocation2] sm:$0xf]
    %v51 = vld [vmem:[#allocation2 + $0x4] sm:$0xf]
    %v52 = vld [vmem:[#allocation2 + $0x8] sm:$0xf]
    %v53 = vld [vmem:[#allocation2 + $0xc] sm:$0xf]
    %v54 = vld [vmem:[#allocation2 + $0x10] sm:$0xf]
    %v55 = vld [vmem:[#allocation2 + $0x14] sm:$0xf]
    %v56 = vld [vmem:[#allocation2 + $0x18] sm:$0xf]
    %v57 = vld [vmem:[#allocation2 + $0x1c] sm:$0xf]
    %v58 = vld [vmem:[#allocation2 + $0x20] sm:$0xf]
    %v59 = vld [vmem:[#allocation2 + $0x24] sm:$0xf]
    %v60 = vld [vmem:[#allocation2 + $0x28] sm:$0xf]
    %v61 = vld [vmem:[#allocation2 + $0x2c] sm:$0xf]
    %v62 = vld [vmem:[#allocation2 + $0x30] sm:$0xf]
    %v63 = vld [vmem:[#allocation2 + $0x34] sm:$0xf]
    %v64 = vld [vmem:[#allocation2 + $0x38] sm:$0xf]
    %v65 = vld [vmem:[#allocation2 + $0x3c] sm:$0xf]
    %v66 = vld [vmem:[#allocation2 + $0x40] sm:$0xf]
    %v67 = vld [vmem:[#allocation2 + $0x44] sm:$0xf]
    %v68 = vld [vmem:[#allocation2 + $0x48] sm:$0xf]
    %v69 = vld [vmem:[#allocation2 + $0x4c] sm:$0xf]
    %v70 = vld [vmem:[#allocation2 + $0x50] sm:$0xf]
    %v71 = vld [vmem:[#allocation2 + $0x54] sm:$0xf]
    %v72 = vld [vmem:[#allocation2 + $0x58] sm:$0xf]
    %v73 = vld [vmem:[#allocation2 + $0x5c] sm:$0xf]
    %v74 = vld [vmem:[#allocation2 + $0x60] sm:$0xf]
    %v75 = vld [vmem:[#allocation2 + $0x64] sm:$0xf]
    %v76 = vld [vmem:[#allocation2 + $0x68] sm:$0xf]
    %v77 = vld [vmem:[#allocation2 + $0x6c] sm:$0xf]
    %v78 = vld [vmem:[#allocation2 + $0x70] sm:$0xf]
    %v79 = vld [vmem:[#allocation2 + $0x74] sm:$0xf]
    %v80 = vld [vmem:[#allocation2 + $0x78] sm:$0xf]
    %v81 = vld [vmem:[#allocation2 + $0x7c] sm:$0xf]
    %v82 = vld [vmem:[%s2] sm:$0x1]
    %v84 = vlaneseq
    %v85 = vshrl.u32 %v84, 7
    %v86 = vsub.s32 0, %v85
    %v87 = vrot.slane %v82, %v86
    %v121 = vunpack.c.l.b16 %v50
    %v122 = vunpack.c.l.b16 %v51
    %v123 = vunpack.c.l.b16 %v52
    %v124 = vunpack.c.l.b16 %v53
    %v125 = vunpack.c.l.b16 %v54
    %v126 = vunpack.c.l.b16 %v55
    %v127 = vunpack.c.l.b16 %v56
    %v128 = vunpack.c.l.b16 %v57
    %v129 = vunpack.c.l.b16 %v58
    %v130 = vunpack.c.l.b16 %v59
    %v131 = vunpack.c.l.b16 %v60
    %v132 = vunpack.c.l.b16 %v61
    %v133 = vunpack.c.l.b16 %v62
    %v134 = vunpack.c.l.b16 %v63
    %v135 = vunpack.c.l.b16 %v64
    %v136 = vunpack.c.l.b16 %v65
    %v137 = vunpack.c.l.b16 %v66
    %v138 = vunpack.c.l.b16 %v67
    %v139 = vunpack.c.l.b16 %v68
    %v140 = vunpack.c.l.b16 %v69
    %v141 = vunpack.c.l.b16 %v70
    %v142 = vunpack.c.l.b16 %v71
    %v143 = vunpack.c.l.b16 %v72
    %v144 = vunpack.c.l.b16 %v73
    %v145 = vunpack.c.l.b16 %v74
    %v146 = vunpack.c.l.b16 %v75
    %v147 = vunpack.c.l.b16 %v76
    %v148 = vunpack.c.l.b16 %v77
    %v149 = vunpack.c.l.b16 %v78
    %v150 = vunpack.c.l.b16 %v79
    %v151 = vunpack.c.l.b16 %v80
    %v152 = vunpack.c.l.b16 %v81
    %v153 = vpack.c.b16 %v122, %v121
    %v154 = vpack.c.b16 %v124, %v123
    %v155 = vpack.c.b16 %v126, %v125
    %v156 = vpack.c.b16 %v128, %v127
    %v157 = vpack.c.b16 %v130, %v129
    %v158 = vpack.c.b16 %v132, %v131
    %v159 = vpack.c.b16 %v134, %v133
    %v160 = vpack.c.b16 %v136, %v135
    %v161 = vpack.c.b16 %v138, %v137
    %v162 = vpack.c.b16 %v140, %v139
    %v163 = vpack.c.b16 %v142, %v141
    %v164 = vpack.c.b16 %v144, %v143
    %v165 = vpack.c.b16 %v146, %v145
    %v166 = vpack.c.b16 %v148, %v147
    %v167 = vpack.c.b16 %v150, %v149
    %v168 = vpack.c.b16 %v152, %v151
    %185 = vmatprep.subr.bf16.mxu0 0
    %186 = vmatpush1.bf16.msra.mxu0 %v160
    %187 = vmatprep.subr.bf16.mxu0 0
    %188 = vmatpush1.bf16.msra.mxu0 %v159
    %189 = vmatprep.subr.bf16.mxu0 0
    %190 = vmatpush1.bf16.msra.mxu0 %v158
    %191 = vmatprep.subr.bf16.mxu0 0
    %192 = vmatpush1.bf16.msra.mxu0 %v157
    %193 = vmatprep.subr.bf16.mxu0 0
    %194 = vmatpush1.bf16.msra.mxu0 %v156
    %195 = vmatprep.subr.bf16.mxu0 0
    %196 = vmatpush1.bf16.msra.mxu0 %v155
    %197 = vmatprep.subr.bf16.mxu0 0
    %198 = vmatpush1.bf16.msra.mxu0 %v154
    %199 = vmatprep.subr.bf16.mxu0 0
    %200 = vmatpush1.bf16.msra.mxu0 %v153
    %201 = vmatprep.subr.bf16.mxu0 0
    %202 = vmatpush2.bf16.msra.mxu0 %v168
    %203 = vmatprep.subr.bf16.mxu0 0
    %204 = vmatpush2.bf16.msra.mxu0 %v167
    %205 = vmatprep.subr.bf16.mxu0 0
    %206 = vmatpush2.bf16.msra.mxu0 %v166
    %207 = vmatprep.subr.bf16.mxu0 0
    %208 = vmatpush2.bf16.msra.mxu0 %v165
    %209 = vmatprep.subr.bf16.mxu0 0
    %210 = vmatpush2.bf16.msra.mxu0 %v164
    %211 = vmatprep.subr.bf16.mxu0 0
    %212 = vmatpush2.bf16.msra.mxu0 %v163
    %213 = vmatprep.subr.bf16.mxu0 0
    %214 = vmatpush2.bf16.msra.mxu0 %v162
    %215 = vmatprep.subr.bf16.mxu0 0
    %216 = vmatpush2.bf16.msra.mxu0 %v161
    %217 = vmatprep.mubr.bf16.mxu0 %v49
    %218 = vmatmul.mubr.bf16.gmra.mxu0 %v48
    %v219 = vpop.f32.mrf.mxu0
    %v220 = vadd.f32 %v87, %v219
    %v221 = vpop.f32.mrf.mxu0
    %v222 = vpop.f32.mrf.mxu0
    %v223 = vpop.f32.mrf.mxu0
    %224 = vdwg.mxu0
    %v225 = vmax.f32 %v220, 0.0
    %v226 = vpack.c.bf16 %v225, %v225
    %v227 = vld [vmem:[%s3] sm:$0xf]
    %v228 = vld [vmem:[%s3 + $0x4] sm:$0xf]
    %v229 = vld [vmem:[%s3 + $0x8] sm:$0xf]
    %v230 = vld [vmem:[%s3 + $0xc] sm:$0xf]
    %v231 = vld [vmem:[%s3 + $0x10] sm:$0xf]
    %v232 = vld [vmem:[%s3 + $0x14] sm:$0xf]
    %v233 = vld [vmem:[%s3 + $0x18] sm:$0xf]
    %v234 = vld [vmem:[%s3 + $0x1c] sm:$0xf]
    %v235 = vld [vmem:[%s3 + $0x20] sm:$0xf]
    %v236 = vld [vmem:[%s3 + $0x24] sm:$0xf]
    %v237 = vld [vmem:[%s3 + $0x28] sm:$0xf]
    %v238 = vld [vmem:[%s3 + $0x2c] sm:$0xf]
    %v239 = vld [vmem:[%s3 + $0x30] sm:$0xf]
    %v240 = vld [vmem:[%s3 + $0x34] sm:$0xf]
    %v241 = vld [vmem:[%s3 + $0x38] sm:$0xf]
    %v242 = vld [vmem:[%s3 + $0x3c] sm:$0xf]
    %v243 = vld [vmem:[%s4] sm:$0x1]
    %v245 = vlaneseq
    %v246 = vshrl.u32 %v245, 7
    %v247 = vsub.s32 0, %v246
    %v248 = vrot.slane %v243, %v247
    %v266 = vunpack.c.l.b16 %v227
    %v267 = vunpack.c.l.b16 %v228
    %v268 = vunpack.c.l.b16 %v229
    %v269 = vunpack.c.l.b16 %v230
    %v270 = vunpack.c.l.b16 %v231
    %v271 = vunpack.c.l.b16 %v232
    %v272 = vunpack.c.l.b16 %v233
    %v273 = vunpack.c.l.b16 %v234
    %v274 = vunpack.c.l.b16 %v235
    %v275 = vunpack.c.l.b16 %v236
    %v276 = vunpack.c.l.b16 %v237
    %v277 = vunpack.c.l.b16 %v238
    %v278 = vunpack.c.l.b16 %v239
    %v279 = vunpack.c.l.b16 %v240
    %v280 = vunpack.c.l.b16 %v241
    %v281 = vunpack.c.l.b16 %v242
    %v282 = vpack.c.b16 %v267, %v266
    %v283 = vpack.c.b16 %v269, %v268
    %v284 = vpack.c.b16 %v271, %v270
    %v285 = vpack.c.b16 %v273, %v272
    %v286 = vpack.c.b16 %v275, %v274
    %v287 = vpack.c.b16 %v277, %v276
    %v288 = vpack.c.b16 %v279, %v278
    %v289 = vpack.c.b16 %v281, %v280
    %298 = vmatprep.subr.bf16.mxu0 0
    %299 = vmatpush1.bf16.msra.mxu0 %v289
    %300 = vmatprep.subr.bf16.mxu0 0
    %301 = vmatpush1.bf16.msra.mxu0 %v288
    %302 = vmatprep.subr.bf16.mxu0 0
    %303 = vmatpush1.bf16.msra.mxu0 %v287
    %304 = vmatprep.subr.bf16.mxu0 0
    %305 = vmatpush1.bf16.msra.mxu0 %v286
    %306 = vmatprep.subr.bf16.mxu0 0
    %307 = vmatpush1.bf16.msra.mxu0 %v285
    %308 = vmatprep.subr.bf16.mxu0 0
    %309 = vmatpush1.bf16.msra.mxu0 %v284
    %310 = vmatprep.subr.bf16.mxu0 0
    %311 = vmatpush1.bf16.msra.mxu0 %v283
    %312 = vmatprep.subr.bf16.mxu0 0
    %313 = vmatpush1.bf16.msra.mxu0 %v282
    %314 = vmatprep.subr.bf16.mxu0 0
    %315 = vmatpush2.bf16.msra.mxu0 0
    %316 = vmatprep.subr.bf16.mxu0 0
    %317 = vmatpush2.bf16.msra.mxu0 0
    %318 = vmatprep.subr.bf16.mxu0 0
    %319 = vmatpush2.bf16.msra.mxu0 0
    %320 = vmatprep.subr.bf16.mxu0 0
    %321 = vmatpush2.bf16.msra.mxu0 0
    %322 = vmatprep.subr.bf16.mxu0 0
    %323 = vmatpush2.bf16.msra.mxu0 0
    %324 = vmatprep.subr.bf16.mxu0 0
    %325 = vmatpush2.bf16.msra.mxu0 0
    %326 = vmatprep.subr.bf16.mxu0 0
    %327 = vmatpush2.bf16.msra.mxu0 0
    %328 = vmatprep.subr.bf16.mxu0 0
    %329 = vmatpush2.bf16.msra.mxu0 0
    %330 = vmatprep.mubr.bf16.mxu0 0
    %331 = vmatmul.mubr.bf16.gmra.mxu0 %v226
    %v332 = vpop.f32.mrf.mxu0
    %v333 = vadd.f32 %v248, %v332
    %v334 = vpop.f32.mrf.mxu0
    %v335 = vpop.f32.mrf.mxu0
    %v336 = vpop.f32.mrf.mxu0
    %337 = vdwg.mxu0
    %vm338 = vcmask 123904
    %339 = vst.msk [vmem:[#allocation5] sm:$0x3] %vm338, %v333
    // Predicated region
    $region26: #{tpu_custom_call.1} parent=1 // pred_check
      _
    $region27: #{tpu_custom_call.1} parent=1 // pred_check_branch
      %341 = sbr.rel (0) target = $region29
    $region28: #{tpu_custom_call.1} parent=1 // pred_region
      %s343 = ssub.s32 32, 32
      %344 = vsyncadd [#allocation4], %s343
      %s346 = sshll.u32 [#allocation5], 4
      %s347 = int_to_ptr.vmem [resolvable:$true] %s346
      %349 = dma.vmem_to_hbm [thread:$0]  %s347, 32, %s5, [#allocation4]
    $region29: #{tpu_custom_call.1} parent=1 // pred_fallthru
      _
    // Predicated region
    $region30: #{tpu_custom_call.1} parent=1 // pred_check
      _
    $region31: #{tpu_custom_call.1} parent=1 // pred_check_branch
      %351 = sbr.rel (0) target = $region33
    $region32: #{tpu_custom_call.1} parent=1 // pred_region
      %352 = dma.done [#allocation4], 32
    $region33: #{tpu_custom_call.1} parent=1 // pred_fallthru
      _
    %353 = vsyncpa [#allocation3], 1
    %354 = vsyncpa [#allocation4], 1

</llo_original>
